<compile_context>
chip_gen: v7x
topology: tpu7x:2x2x1
jax: 0.10.0
libtpu: 0.0.40
codegen_flags: <defaults>
</compile_context>

<pallas_src>
import jax
import jax.numpy as jnp
from jax.experimental import pallas as pl
from jax.experimental.pallas import tpu as pltpu

IN_FEATURES = 4
HIDDEN = 50
NUM_CLASSES = 3
LANES = 128  # lane-dense slab width used only inside the kernel


def _round_up(n, m):
    return ((n + m - 1) // m) * m


def irisnet_kernel(x_ref, w1_ref, w23_ref, b_ref, o_ref):
    x = x_ref[...]                                   # (TB, 4)
    b = b_ref[...]                                   # (2, 128) packed biases
    b1 = b[0:1, :HIDDEN]                             # (1, 50)
    b23 = b[1:2, :]                                  # (1, 128); cols >= 3 hold -1e30

    # fc1 + ReLU
    h1 = jnp.dot(x, w1_ref[...], preferred_element_type=jnp.float32) + b1
    h1 = jnp.maximum(h1, 0.0)                        # (TB, 50)

    # fused fc2∘fc3 into a 128-lane slab (in-register / VMEM scratch only;
    # padded lanes get logits ~ -1e30 so they contribute exactly 0 below)
    logits = jnp.dot(h1, w23_ref[...], preferred_element_type=jnp.float32) + b23

    # numerically stable softmax
    m = jnp.max(logits, axis=-1, keepdims=True)
    e = jnp.exp(logits - m)
    denom = jnp.sum(e, axis=-1, keepdims=True)
    probs = e / denom                                # exact division; compute is free here

    # store only the real classes — the 128-wide slab never touches HBM
    o_ref[...] = probs[:, :NUM_CLASSES]


def prepare_params(params):
    """One-time parameter preprocessing, hoisted out of the per-call forward:
    algebraic fusion of fc2∘fc3 (no activation between them), lane padding of
    the fused weight, and packing of both biases into one (2,128) buffer."""
    w1, b1, w2, b2, w3, b3 = params
    w23 = w2 @ w3                                    # (50, 3)
    b23 = b2 @ w3 + b3                               # (1, 3)

    w23_p = jnp.zeros((HIDDEN, LANES), jnp.float32).at[:, :NUM_CLASSES].set(w23)

    bias_pack = jnp.full((2, LANES), -1e30, jnp.float32)
    bias_pack = bias_pack.at[0, :].set(0.0)                  # row 0: fc1 bias lane pad
    bias_pack = bias_pack.at[0, :HIDDEN].set(b1[0])
    bias_pack = bias_pack.at[1, :NUM_CLASSES].set(b23[0])    # row 1: fused bias, rest -1e30

    return (w1.astype(jnp.float32), w23_p, bias_pack)


def irisnet_forward(x, prepared, block_b=4096):
    w1, w23_p, bias_pack = prepared
    B = x.shape[0]

    # --- batch tiling -----------------------------------------------------
    block_b = _round_up(max(block_b, 8), 8)          # f32 sublane constraint
    TB = min(block_b, _round_up(B, 8))
    # guarantee >= 2 grid steps when possible so the "parallel" axis actually
    # spans both v7x TensorCores (harmless on v5e/v6e)
    if pl.cdiv(B, TB) == 1 and TB >= 16:
        TB = _round_up(TB // 2, 8)
    n_blocks = pl.cdiv(B, TB)
    B_pad = n_blocks * TB
    if B_pad != B:
        # TODO(synk): for large ragged batches, mask the tail tile in-kernel
        # instead of materializing a padded copy of x.
        x = jnp.pad(x, ((0, B_pad - B), (0, 0)))

    out = pl.pallas_call(
        irisnet_kernel,
        out_shape=jax.ShapeDtypeStruct((B_pad, NUM_CLASSES), jnp.float32),
        grid=(n_blocks,),
        in_specs=[
            pl.BlockSpec((TB, IN_FEATURES), lambda i: (i, 0)),      # x: tiled
            pl.BlockSpec((IN_FEATURES, HIDDEN), lambda i: (0, 0)),  # W1: resident
            pl.BlockSpec((HIDDEN, LANES), lambda i: (0, 0)),        # W2@W3: resident
            pl.BlockSpec((2, LANES), lambda i: (0, 0)),             # biases: resident
        ],
        # last block dim == full array dim (3), so the (8,128) rule is satisfied
        out_specs=pl.BlockSpec((TB, NUM_CLASSES), lambda i: (i, 0)),
        compiler_params=pltpu.CompilerParams(
            dimension_semantics=("parallel",),        # v7x: shard tiles over 2 TCs
            vmem_limit_bytes=32 * 1024 * 1024,        # safe ceiling on v5e/v6e/v7x
        ),
    )(x, w1, w23_p, bias_pack)

    if B_pad != B:
        out = out[:B]
    return out


def init_params(key):
    """Deterministic xavier-uniform weights, constant-filled biases
    (mirrors IrisNet.init_weights shapes; values are synthetic)."""
    def xavier(key, fan_in, fan_out):
        limit = (6.0 / (fan_in + fan_out)) ** 0.5
        return jax.random.uniform(key, (fan_in, fan_out), jnp.float32,
                                  minval=-limit, maxval=limit)

    k1, k2, k3, kb = jax.random.split(key, 4)
    bias_fill = jax.random.uniform(kb, (), jnp.float32)  # np.random.uniform() analogue
    w1 = xavier(k1, IN_FEATURES, HIDDEN)
    w2 = xavier(k2, HIDDEN, HIDDEN)
    w3 = xavier(k3, HIDDEN, NUM_CLASSES)
    b1 = jnp.full((1, HIDDEN), bias_fill, jnp.float32)
    b2 = jnp.full((1, HIDDEN), bias_fill, jnp.float32)
    b3 = jnp.full((1, NUM_CLASSES), bias_fill, jnp.float32)
    return (w1, b1, w2, b2, w3, b3)


def reference_forward(x, params):
    """Un-fused reference, exactly the PyTorch forward structure."""
    w1, b1, w2, b2, w3, b3 = params
    h1 = jnp.maximum(x @ w1 + b1, 0.0)
    h2 = h1 @ w2 + b2
    logits = h2 @ w3 + b3
    return jax.nn.softmax(logits, axis=1)


if __name__ == "__main__":
    key = jax.random.PRNGKey(0)
    kx, kp = jax.random.split(key)

    # Iris: 4 features; non-multiple-of-8 batch exercises padding + the
    # multi-block (n_blocks >= 2) path at demo scale.
    B = 13
    x = jax.random.normal(kx, (B, IN_FEATURES), jnp.float32)
    params = init_params(kp)
    prepared = prepare_params(params)            # one-time preprocessing

    fwd = jax.jit(irisnet_forward, static_argnames=("block_b",))
    out = jax.block_until_ready(fwd(x, prepared))

    ref = reference_forward(x, params)
    assert out.shape == (B, NUM_CLASSES)
    # fused W2@W3 changes summation order -> ~1e-6 fp differences
    assert jnp.allclose(out, ref, atol=1e-4, rtol=1e-4), "mismatch vs JAX reference"
    # exact division in the kernel: rows sum to 1 to fp32 rounding
    assert jnp.allclose(jnp.sum(out, axis=1), 1.0, atol=1e-5), "softmax rows must sum to 1"

    print("KERNEL_OK")
</pallas_src>

<mosaic_0001>
module attributes {stable_mosaic.version = 11 : i64} {
  func.func @irisnet_kernel(%arg0: i32, %arg1: memref<8x4xf32, #tpu.memory_space<vmem>>, %arg2: memref<4x50xf32, #tpu.memory_space<vmem>>, %arg3: memref<50x128xf32, #tpu.memory_space<vmem>>, %arg4: memref<2x128xf32, #tpu.memory_space<vmem>>, %arg5: memref<8x3xf32, #tpu.memory_space<vmem>>) attributes {dimension_semantics = [#tpu.dimension_semantics<parallel>], iteration_bounds = array<i64: 2>, scalar_prefetch = 0 : i64, scratch_operands = 0 : i64, tpu.core_type = #tpu.core_type<tc>, window_params = [{transform_indices = @transform_0, window_bounds = array<i64: 8, 4>}, {pipeline_mode = #tpu.pipeline_mode<synchronous>, transform_indices = @transform_1, window_bounds = array<i64: 4, 50>}, {pipeline_mode = #tpu.pipeline_mode<synchronous>, transform_indices = @transform_2, window_bounds = array<i64: 50, 128>}, {pipeline_mode = #tpu.pipeline_mode<synchronous>, transform_indices = @transform_3, window_bounds = array<i64: 2, 128>}, {transform_indices = @transform_4, window_bounds = array<i64: 8, 3>}]} {
    %c0 = arith.constant 0 : index
    %c0_0 = arith.constant 0 : index
    %0 = vector.load %arg1[%c0, %c0_0] : memref<8x4xf32, #tpu.memory_space<vmem>>, vector<8x4xf32>
    %c0_1 = arith.constant 0 : index
    %c0_2 = arith.constant 0 : index
    %1 = vector.load %arg4[%c0_1, %c0_2] : memref<2x128xf32, #tpu.memory_space<vmem>>, vector<2x128xf32>
    %2 = vector.extract_strided_slice %1 {offsets = [0, 0], sizes = [1, 50], strides = [1, 1]} : vector<2x128xf32> to vector<1x50xf32>
    %3 = vector.extract_strided_slice %1 {offsets = [1, 0], sizes = [1, 128], strides = [1, 1]} : vector<2x128xf32> to vector<1x128xf32>
    %c0_3 = arith.constant 0 : index
    %c0_4 = arith.constant 0 : index
    %4 = vector.load %arg2[%c0_3, %c0_4] : memref<4x50xf32, #tpu.memory_space<vmem>>, vector<4x50xf32>
    %cst = arith.constant dense<0.000000e+00> : vector<8x50xf32>
    %5 = tpu.matmul %0, %4, %cst {dimension_numbers = #tpu.dot_dimension_numbers<[1], [0], [0], [1], [0, 0, 1, 1], [], []>} : vector<8x4xf32>, vector<4x50xf32>, vector<8x50xf32> -> vector<8x50xf32>
    %6 = vector.broadcast %2 : vector<1x50xf32> to vector<8x50xf32>
    %7 = arith.addf %5, %6 : vector<8x50xf32>
    %cst_5 = arith.constant 0.000000e+00 : f32
    %8 = vector.broadcast %cst_5 : f32 to vector<8x50xf32>
    %9 = arith.maximumf %7, %8 : vector<8x50xf32>
    %c0_6 = arith.constant 0 : index
    %c0_7 = arith.constant 0 : index
    %10 = vector.load %arg3[%c0_6, %c0_7] : memref<50x128xf32, #tpu.memory_space<vmem>>, vector<50x128xf32>
    %cst_8 = arith.constant dense<0.000000e+00> : vector<8x128xf32>
    %11 = tpu.matmul %9, %10, %cst_8 {dimension_numbers = #tpu.dot_dimension_numbers<[1], [0], [0], [1], [0, 0, 1, 1], [], []>} : vector<8x50xf32>, vector<50x128xf32>, vector<8x128xf32> -> vector<8x128xf32>
    %12 = vector.broadcast %3 : vector<1x128xf32> to vector<8x128xf32>
    %13 = arith.addf %11, %12 : vector<8x128xf32>
    %cst_9 = arith.constant dense<0xFF800000> : vector<8xf32>
    %14 = vector.multi_reduction <maximumf>, %13, %cst_9 [1] : vector<8x128xf32> to vector<8xf32>
    %15 = vector.shape_cast %14 : vector<8xf32> to vector<8x1xf32>
    %16 = vector.broadcast %15 : vector<8x1xf32> to vector<8x128xf32>
    %17 = arith.subf %13, %16 : vector<8x128xf32>
    %18 = math.exp %17 : vector<8x128xf32>
    %cst_10 = arith.constant dense<0.000000e+00> : vector<8xf32>
    %19 = vector.multi_reduction <add>, %18, %cst_10 [1] : vector<8x128xf32> to vector<8xf32>
    %20 = vector.shape_cast %19 : vector<8xf32> to vector<8x1xf32>
    %21 = vector.broadcast %20 : vector<8x1xf32> to vector<8x128xf32>
    %22 = arith.divf %18, %21 : vector<8x128xf32>
    %23 = vector.extract_strided_slice %22 {offsets = [0, 0], sizes = [8, 3], strides = [1, 1]} : vector<8x128xf32> to vector<8x3xf32>
    %c0_11 = arith.constant 0 : index
    %c0_12 = arith.constant 0 : index
    %24 = vector.load %arg5[%c0_11, %c0_12] : memref<8x3xf32, #tpu.memory_space<vmem>>, vector<8x3xf32>
    tpu.vector_store %arg5[%c0_11, %c0_12], %23 {strides = array<i32>} : memref<8x3xf32, #tpu.memory_space<vmem>>, vector<8x3xf32>,
    return
  }
  func.func @transform_0(%arg0: i32) -> (i32, i32) {
    %c0_i32 = arith.constant 0 : i32
    %c0_i32_0 = arith.constant 0 : i32
    return %arg0, %c0_i32 : i32, i32
  }
  func.func @transform_1(%arg0: i32) -> (i32, i32) {
    %c0_i32 = arith.constant 0 : i32
    %c0_i32_0 = arith.constant 0 : i32
    %c0_i32_1 = arith.constant 0 : i32
    return %c0_i32, %c0_i32_0 : i32, i32
  }
  func.func @transform_2(%arg0: i32) -> (i32, i32) {
    %c0_i32 = arith.constant 0 : i32
    %c0_i32_0 = arith.constant 0 : i32
    %c0_i32_1 = arith.constant 0 : i32
    return %c0_i32, %c0_i32_0 : i32, i32
  }
  func.func @transform_3(%arg0: i32) -> (i32, i32) {
    %c0_i32 = arith.constant 0 : i32
    %c0_i32_0 = arith.constant 0 : i32
    %c0_i32_1 = arith.constant 0 : i32
    return %c0_i32, %c0_i32_0 : i32, i32
  }
  func.func @transform_4(%arg0: i32) -> (i32, i32) {
    %c0_i32 = arith.constant 0 : i32
    %c0_i32_0 = arith.constant 0 : i32
    return %arg0, %c0_i32 : i32, i32
  }
}

</mosaic_0001>

<llo_original>
// kernel: irisnet_forward.1
$region0: #{irisnet_forward.1}
  #allocation0 [shape = 'u32[]', space=smem, size = 0x4, offset = 0x4, fixed_abs, tag = 'smem constant byte address 0x4 - core index']
  #allocation1 [shape = 'u32[144,128]{1,0:T(1,128)}', space=vmem, size = 0x12000, scoped, tag = 'internal scratch']
  %s0 = inlined_call_operand.vmem [shape: f32[16,4], index: 0, kind: input, shape index: {}]
  %s1 = inlined_call_operand.vmem [shape: f32[4,50], index: 1, kind: input, shape index: {}]
  %s2 = inlined_call_operand.vmem [shape: f32[50,128], index: 2, kind: input, shape index: {}]
  %s3 = inlined_call_operand.vmem [shape: f32[2,128], index: 3, kind: input, shape index: {}]
  %s4 = inlined_call_operand.vmem [shape: f32[16,3], index: 4, kind: output, shape index: {}]
  %s5 = sld [smem:[#allocation0]]
  $region49: #{irisnet_forward.1} parent=0
    _
  %s7 = ssub.s32 1, %s5
  %s8 = scalar_select 0, %s7, %s5
  loop: start=0, step=1, limit=4
  $region2: #{irisnet_forward.1} parent=0 // loop_pre_header
    _
  $region3: #{irisnet_forward.1} parent=0 // loop_header
    %s10 = sphi 0, %s14
    %p11 = scmp.ge.s32.totalorder %s10, 4
    %s20 = sphi 0, %s22
    %s23 = sphi 0, %s20
    %s24 = sphi 0, %s23
    %s40 = sphi 0, %s24
    %s44 = sphi 0, %s44
    %s46 = sphi 0, %s44
    %s47 = sphi 0, %s46
    %s61 = sphi 0, %s47
    %s65 = sphi 0, %s65
    %s67 = sphi 0, %s65
    %s68 = sphi 0, %s67
    %s82 = sphi 0, %s68
    %s86 = sphi 0, %s86
    %s88 = sphi 0, %s86
    %s89 = sphi 0, %s88
    %s103 = sphi 0, %s89
    %s109 = sphi 0, %s111
    %s112 = sphi 0, %s109
    %s113 = sphi 0, %s112
    %s129 = sphi 0, %s113
  $region4: #{irisnet_forward.1} parent=0 // loop_header_branch
    %13 = sbr.rel (%p11) target = $region8
  $region5: #{irisnet_forward.1} parent=0 // loop_body
    %s15 = ssub.s32 %s10, 1
    %s16 = ssub.s32 %s10, 2
    %s17 = sadd.s32 %s10, 1
    %s18 = ssub.s32 %s10, %s17
    %p19 = scmp.eq.s32.totalorder %s18, 0
    %s21 = sadd.s32 %s20, 1
    %s22 = scalar_select %p19, %s20, %s21
    %p25 = pneg %p19
    %p26 = scmp.eq.s32.totalorder %s10, 1
    %p27 = por %p25, %p26
    %p28 = scmp.ne.s32.totalorder %s20, %s23
    %p29 = scmp.eq.s32.totalorder %s10, 0
    %p30 = por %p28, %p29
    %p31 = scmp.ne.s32.totalorder %s20, %s23
    %p32 = scmp.eq.s32.totalorder %s15, 1
    %p33 = por %p31, %p32
    %p34 = scmp.ne.s32.totalorder %s23, %s24
    %p35 = scmp.eq.s32.totalorder %s15, 0
    %p36 = por %p34, %p35
    %p37 = scmp.ne.s32.totalorder %s23, %s24
    %p38 = scmp.eq.s32.totalorder %s16, 1
    %p39 = por %p37, %p38
    %p41 = scmp.ne.s32.totalorder %s24, %s40
    %p42 = scmp.eq.s32.totalorder %s16, 0
    %p43 = por %p41, %p42
    %s45 = sadd.s32 %s44, 1
    %p48 = scmp.eq.s32.totalorder %s10, 1
    %p49 = scmp.ne.s32.totalorder %s44, %s46
    %p50 = scmp.eq.s32.totalorder %s10, 0
    %p51 = por %p49, %p50
    %p52 = scmp.ne.s32.totalorder %s44, %s46
    %p53 = scmp.eq.s32.totalorder %s15, 1
    %p54 = por %p52, %p53
    %p55 = scmp.ne.s32.totalorder %s46, %s47
    %p56 = scmp.eq.s32.totalorder %s15, 0
    %p57 = por %p55, %p56
    %p58 = scmp.ne.s32.totalorder %s46, %s47
    %p59 = scmp.eq.s32.totalorder %s16, 1
    %p60 = por %p58, %p59
    %p62 = scmp.ne.s32.totalorder %s47, %s61
    %p63 = scmp.eq.s32.totalorder %s16, 0
    %p64 = por %p62, %p63
    %s66 = sadd.s32 %s65, 1
    %p69 = scmp.eq.s32.totalorder %s10, 1
    %p70 = scmp.ne.s32.totalorder %s65, %s67
    %p71 = scmp.eq.s32.totalorder %s10, 0
    %p72 = por %p70, %p71
    %p73 = scmp.ne.s32.totalorder %s65, %s67
    %p74 = scmp.eq.s32.totalorder %s15, 1
    %p75 = por %p73, %p74
    %p76 = scmp.ne.s32.totalorder %s67, %s68
    %p77 = scmp.eq.s32.totalorder %s15, 0
    %p78 = por %p76, %p77
    %p79 = scmp.ne.s32.totalorder %s67, %s68
    %p80 = scmp.eq.s32.totalorder %s16, 1
    %p81 = por %p79, %p80
    %p83 = scmp.ne.s32.totalorder %s68, %s82
    %p84 = scmp.eq.s32.totalorder %s16, 0
    %p85 = por %p83, %p84
    %s87 = sadd.s32 %s86, 1
    %p90 = scmp.eq.s32.totalorder %s10, 1
    %p91 = scmp.ne.s32.totalorder %s86, %s88
    %p92 = scmp.eq.s32.totalorder %s10, 0
    %p93 = por %p91, %p92
    %p94 = scmp.ne.s32.totalorder %s86, %s88
    %p95 = scmp.eq.s32.totalorder %s15, 1
    %p96 = por %p94, %p95
    %p97 = scmp.ne.s32.totalorder %s88, %s89
    %p98 = scmp.eq.s32.totalorder %s15, 0
    %p99 = por %p97, %p98
    %p100 = scmp.ne.s32.totalorder %s88, %s89
    %p101 = scmp.eq.s32.totalorder %s16, 1
    %p102 = por %p100, %p101
    %p104 = scmp.ne.s32.totalorder %s89, %s103
    %p105 = scmp.eq.s32.totalorder %s16, 0
    %p106 = por %p104, %p105
    %s107 = ssub.s32 %s10, %s17
    %p108 = scmp.eq.s32.totalorder %s107, 0
    %s110 = sadd.s32 %s109, 1
    %s111 = scalar_select %p108, %s109, %s110
    %p114 = pneg %p108
    %p115 = scmp.eq.s32.totalorder %s10, 1
    %p116 = por %p114, %p115
    %p117 = scmp.ne.s32.totalorder %s109, %s112
    %p118 = scmp.eq.s32.totalorder %s10, 0
    %p119 = por %p117, %p118
    %p120 = scmp.ne.s32.totalorder %s109, %s112
    %p121 = scmp.eq.s32.totalorder %s15, 1
    %p122 = por %p120, %p121
    %p123 = scmp.ne.s32.totalorder %s112, %s113
    %p124 = scmp.eq.s32.totalorder %s15, 0
    %p125 = por %p123, %p124
    %p126 = scmp.ne.s32.totalorder %s112, %s113
    %p127 = scmp.eq.s32.totalorder %s16, 1
    %p128 = por %p126, %p127
    %p130 = scmp.ne.s32.totalorder %s113, %s129
    %p131 = scmp.eq.s32.totalorder %s16, 0
    %p132 = por %p130, %p131
    %p133 = scmp.le.s32.totalorder 1, %s10
    %p134 = scmp.lt.s32.totalorder %s10, 3
    %p135 = pnand %p133, %p134
    %p136 = pneg %p135
    // Predicated region
    $region9: #{irisnet_forward.1} parent=5 // pred_check
      _
    $region10: #{irisnet_forward.1} parent=5 // pred_check_branch
      %138 = sbr.rel (%p135) target = $region12
    $region11: #{irisnet_forward.1} parent=5 // pred_region
      %s139 = ssub.s32 %s10, 1
      // Predicated region
      $region13: #{irisnet_forward.1} parent=11 // pred_check
        %p140 = pneg %p57
      $region14: #{irisnet_forward.1} parent=11 // pred_check_branch
        %142 = sbr.rel (%p140) target = $region16
      $region15: #{irisnet_forward.1} parent=11 // pred_region
        _
      $region16: #{irisnet_forward.1} parent=11 // pred_fallthru
        _
      // Predicated region
      $region17: #{irisnet_forward.1} parent=11 // pred_check
        %p143 = pneg %p78
      $region18: #{irisnet_forward.1} parent=11 // pred_check_branch
        %145 = sbr.rel (%p143) target = $region20
      $region19: #{irisnet_forward.1} parent=11 // pred_region
        _
      $region20: #{irisnet_forward.1} parent=11 // pred_fallthru
        _
      // Predicated region
      $region21: #{irisnet_forward.1} parent=11 // pred_check
        %p146 = pneg %p99
      $region22: #{irisnet_forward.1} parent=11 // pred_check_branch
        %148 = sbr.rel (%p146) target = $region24
      $region23: #{irisnet_forward.1} parent=11 // pred_region
        _
      $region24: #{irisnet_forward.1} parent=11 // pred_fallthru
        _
    $region12: #{irisnet_forward.1} parent=5 // pred_fallthru
      _
    %p149 = scmp.lt.s32.totalorder %s10, 2
    // Predicated region
    $region25: #{irisnet_forward.1} parent=5 // pred_check
      %p150 = pneg %p149
    $region26: #{irisnet_forward.1} parent=5 // pred_check_branch
      %152 = sbr.rel (%p150) target = $region28
    $region27: #{irisnet_forward.1} parent=5 // pred_region
      // Predicated region
      $region29: #{irisnet_forward.1} parent=27 // pred_check
        %p153 = pneg %p30
      $region30: #{irisnet_forward.1} parent=27 // pred_check_branch
        %155 = sbr.rel (%p153) target = $region32
      $region31: #{irisnet_forward.1} parent=27 // pred_region
        %p156 = scmp.lt.s32.totalorder %s10, 1
        %s157 = scalar_select %p156, %s10, 1
        %s158 = smul.addr %s157, 8
        %s159 = scalar_lea.vmem %s0, %s158
      $region32: #{irisnet_forward.1} parent=27 // pred_fallthru
        _
    $region28: #{irisnet_forward.1} parent=5 // pred_fallthru
      _
    %p160 = scmp.le.s32.totalorder 1, %s10
    %p161 = scmp.lt.s32.totalorder %s10, 3
    %p162 = pnand %p160, %p161
    %p163 = pneg %p162
    // Predicated region
    $region33: #{irisnet_forward.1} parent=5 // pred_check
      _
    $region34: #{irisnet_forward.1} parent=5 // pred_check_branch
      %165 = sbr.rel (%p162) target = $region36
    $region35: #{irisnet_forward.1} parent=5 // pred_region
      %s166 = ssub.s32 %s10, 1
      %p167 = scmp.lt.s32.totalorder %s15, 1
      %s168 = scalar_select %p167, %s15, 1
      %s169 = smul.addr %s168, 8
      %s170 = scalar_lea.vmem %s0, %s169
      %p171 = pneg %p36
      %p172 = pneg %p33
      %p173 = pneg %p57
      %p174 = pneg %p54
      %p175 = pneg %p78
      %p176 = pneg %p75
      %p177 = pneg %p99
      %p178 = pneg %p96
      %p179 = pneg %p125
      %p180 = pneg %p122
      %p181 = scmp.lt.s32.totalorder %s15, 1
      %s182 = scalar_select %p181, %s15, 1
      %s183 = smul.addr %s182, 8
      %s184 = scalar_lea.vmem %s4, %s183
      %p185 = scmp.lt.s32.totalorder %s15, 1
      %s186 = scalar_select %p185, %s15, 1
      %s187 = smul.addr %s186, 8
      %s188 = scalar_lea.vmem %s0, %s187
      %p189 = scmp.lt.s32.totalorder %s15, 1
      %s190 = scalar_select %p189, %s15, 1
      %s191 = smul.addr %s190, 8
      %s192 = scalar_lea.vmem %s4, %s191
      %v193 = vld [vmem:[%s188] sm:$0xff]
      %v194 = vld [vmem:[%s3] sm:$0x3]
      %v195 = vld [vmem:[%s1] sm:$0xf]
      %v196 = vlaneseq
      %v197 = vshrl.u32 %v196, 7
      %v198 = vsub.s32 0, %v197
      %v199 = vrot.slane %v194, %v198
      %vm200 = vcmask 31744
      %v202 = vsel %vm200, %v193, 0
      %vm204 = vcmask 1043456
      %v206 = vsel %vm204, %v195, 0
      %208 = vmatprep.subr.mxu0 0.0
      %209 = vmatpush1.msra.mxu0 %v206
      %210 = vmatprep.subr.mxu0 0.0
      %211 = vmatpush1.msra.mxu0 0.0
      %212 = vmatprep.subr.mxu0 0.0
      %213 = vmatpush1.msra.mxu0 0.0
      %214 = vmatprep.subr.mxu0 0.0
      %215 = vmatpush1.msra.mxu0 0.0
      %216 = vmatprep.subr.mxu0 0.0
      %217 = vmatpush1.msra.mxu0 0.0
      %218 = vmatprep.subr.mxu0 0.0
      %219 = vmatpush1.msra.mxu0 0.0
      %220 = vmatprep.subr.mxu0 0.0
      %221 = vmatpush1.msra.mxu0 0.0
      %222 = vmatprep.subr.mxu0 0.0
      %223 = vmatpush1.msra.mxu0 0.0
      %224 = vmatprep.subr.mxu0 0.0
      %225 = vmatpush1.msra.mxu0 0.0
      %226 = vmatprep.subr.mxu0 0.0
      %227 = vmatpush1.msra.mxu0 0.0
      %228 = vmatprep.subr.mxu0 0.0
      %229 = vmatpush1.msra.mxu0 0.0
      %230 = vmatprep.subr.mxu0 0.0
      %231 = vmatpush1.msra.mxu0 0.0
      %232 = vmatprep.subr.mxu0 0.0
      %233 = vmatpush1.msra.mxu0 0.0
      %234 = vmatprep.subr.mxu0 0.0
      %235 = vmatpush1.msra.mxu0 0.0
      %236 = vmatprep.subr.mxu0 0.0
      %237 = vmatpush1.msra.mxu0 0.0
      %238 = vmatprep.subr.mxu0 0.0
      %239 = vmatpush1.msra.mxu0 0.0
      %240 = vmatprep.subr.mxu0 0.0
      %241 = vmatpush1.msra.mxu0 0.0
      %242 = vmatprep.subr.mxu0 0.0
      %243 = vmatpush1.msra.mxu0 0.0
      %244 = vmatprep.subr.mxu0 0.0
      %245 = vmatpush1.msra.mxu0 0.0
      %246 = vmatprep.subr.mxu0 0.0
      %247 = vmatpush1.msra.mxu0 0.0
      %248 = vmatprep.subr.mxu0 0.0
      %249 = vmatpush1.msra.mxu0 0.0
      %250 = vmatprep.subr.mxu0 0.0
      %251 = vmatpush1.msra.mxu0 0.0
      %252 = vmatprep.subr.mxu0 0.0
      %253 = vmatpush1.msra.mxu0 0.0
      %254 = vmatprep.subr.mxu0 0.0
      %255 = vmatpush1.msra.mxu0 0.0
      %256 = vmatprep.subr.mxu0 0.0
      %257 = vmatpush1.msra.mxu0 0.0
      %258 = vmatprep.subr.mxu0 0.0
      %259 = vmatpush1.msra.mxu0 0.0
      %260 = vmatprep.subr.mxu0 0.0
      %261 = vmatpush1.msra.mxu0 0.0
      %262 = vmatprep.subr.mxu0 0.0
      %263 = vmatpush1.msra.mxu0 0.0
      %264 = vmatprep.subr.mxu0 0.0
      %265 = vmatpush1.msra.mxu0 0.0
      %266 = vmatprep.subr.mxu0 0.0
      %267 = vmatpush1.msra.mxu0 0.0
      %268 = vmatprep.subr.mxu0 0.0
      %269 = vmatpush1.msra.mxu0 0.0
      %270 = vmatprep.subr.mxu0 0.0
      %271 = vmatpush1.msra.mxu0 0.0
      %272 = vmatprep.mubr.f32.mxu0 0.0
      %273 = vmatmul.mubr.f32.gmra.mrb[0].mxu0 %v202
      %v274 = vpop.f32.mrb[0].mxu0
      %v275 = vadd.f32 %v199, %v274
      %v276 = vpop.f32.mrb[0].mxu0
      %277 = vdwg.mxu0
      %v278 = vmax.f32 %v275, 0.0
      %v279 = vld [vmem:[%s2] sm:$0xff]
      %v280 = vld [vmem:[%s2 + $0x8] sm:$0xff]
      %v281 = vld [vmem:[%s2 + $0x10] sm:$0xff]
      %v282 = vld [vmem:[%s2 + $0x18] sm:$0xff]
      %v283 = vld [vmem:[%s2 + $0x20] sm:$0xff]
      %v284 = vld [vmem:[%s2 + $0x28] sm:$0xff]
      %v285 = vld [vmem:[%s2 + $0x30] sm:$0x3]
      %v286 = vlaneseq
      %v287 = vshrl.u32 %v286, 7
      %v288 = vsub.s32 1, %v287
      %v289 = vrot.slane %v194, %v288
      %vm290 = vcmask 408576
      %v292 = vsel %vm290, %v278, 0
      %vm294 = vcmask 1041408
      %v296 = vsel %vm294, %v285, 0
      %298 = vmatprep.subr.mxu0 0.0
      %299 = vmatpush1.msra.mxu0 %v279
      %300 = vmatprep.subr.mxu0 0.0
      %301 = vmatpush1.msra.mxu0 %v280
      %302 = vmatprep.subr.mxu0 0.0
      %303 = vmatpush1.msra.mxu0 %v281
      %304 = vmatprep.subr.mxu0 0.0
      %305 = vmatpush1.msra.mxu0 %v282
      %306 = vmatprep.subr.mxu0 0.0
      %307 = vmatpush1.msra.mxu0 %v283
      %308 = vmatprep.subr.mxu0 0.0
      %309 = vmatpush1.msra.mxu0 %v284
      %310 = vmatprep.subr.mxu0 0.0
      %311 = vmatpush1.msra.mxu0 %v296
      %312 = vmatprep.subr.mxu0 0.0
      %313 = vmatpush1.msra.mxu0 0.0
      %314 = vmatprep.subr.mxu0 0.0
      %315 = vmatpush1.msra.mxu0 0.0
      %316 = vmatprep.subr.mxu0 0.0
      %317 = vmatpush1.msra.mxu0 0.0
      %318 = vmatprep.subr.mxu0 0.0
      %319 = vmatpush1.msra.mxu0 0.0
      %320 = vmatprep.subr.mxu0 0.0
      %321 = vmatpush1.msra.mxu0 0.0
      %322 = vmatprep.subr.mxu0 0.0
      %323 = vmatpush1.msra.mxu0 0.0
      %324 = vmatprep.subr.mxu0 0.0
      %325 = vmatpush1.msra.mxu0 0.0
      %326 = vmatprep.subr.mxu0 0.0
      %327 = vmatpush1.msra.mxu0 0.0
      %328 = vmatprep.subr.mxu0 0.0
      %329 = vmatpush1.msra.mxu0 0.0
      %330 = vmatprep.subr.mxu0 0.0
      %331 = vmatpush1.msra.mxu0 0.0
      %332 = vmatprep.subr.mxu0 0.0
      %333 = vmatpush1.msra.mxu0 0.0
      %334 = vmatprep.subr.mxu0 0.0
      %335 = vmatpush1.msra.mxu0 0.0
      %336 = vmatprep.subr.mxu0 0.0
      %337 = vmatpush1.msra.mxu0 0.0
      %338 = vmatprep.subr.mxu0 0.0
      %339 = vmatpush1.msra.mxu0 0.0
      %340 = vmatprep.subr.mxu0 0.0
      %341 = vmatpush1.msra.mxu0 0.0
      %342 = vmatprep.subr.mxu0 0.0
      %343 = vmatpush1.msra.mxu0 0.0
      %344 = vmatprep.subr.mxu0 0.0
      %345 = vmatpush1.msra.mxu0 0.0
      %346 = vmatprep.subr.mxu0 0.0
      %347 = vmatpush1.msra.mxu0 0.0
      %348 = vmatprep.subr.mxu0 0.0
      %349 = vmatpush1.msra.mxu0 0.0
      %350 = vmatprep.subr.mxu0 0.0
      %351 = vmatpush1.msra.mxu0 0.0
      %352 = vmatprep.subr.mxu0 0.0
      %353 = vmatpush1.msra.mxu0 0.0
      %354 = vmatprep.subr.mxu0 0.0
      %355 = vmatpush1.msra.mxu0 0.0
      %356 = vmatprep.subr.mxu0 0.0
      %357 = vmatpush1.msra.mxu0 0.0
      %358 = vmatprep.subr.mxu0 0.0
      %359 = vmatpush1.msra.mxu0 0.0
      %360 = vmatprep.subr.mxu0 0.0
      %361 = vmatpush1.msra.mxu0 0.0
      %362 = vmatprep.mubr.f32.mxu0 0.0
      %363 = vmatmul.mubr.f32.gmra.mrb[0].mxu0 %v292
      %v364 = vpop.f32.mrb[0].mxu0
      %v365 = vadd.f32 %v289, %v364
      %v366 = vpop.f32.mrb[0].mxu0
      %367 = vdwg.mxu0
      %368 = vmax.xlane.f32.xlu0 %v365
      %v369 = vpop.xlane.xlu0 %368
      %v370 = vsub.f32 %v365, %v369
      %v371 = vmul.f32 %v370, 1.442695
      %v372 = vpow.pop %v371
      %373 = vadd.xlane.f32.xlu0 %v372
      %v374 = vpop.xlane.xlu0 %373
      %v375 = vrcp.pop %v374
      %v376 = vmul.f32 %v372, %v375
      %vm377 = vcmask 23552
      %378 = vst.msk [vmem:[%s192] sm:$0xff] %vm377, %v376
      %p379 = scmp.lt.s32.totalorder %s15, 1
      %s380 = scalar_select %p379, %s15, 1
      %s381 = smul.addr %s380, 8
      %s382 = scalar_lea.vmem %s4, %s381
      // Predicated region
      $region37: #{irisnet_forward.1} parent=35 // pred_check
        %p383 = pneg %p122
      $region38: #{irisnet_forward.1} parent=35 // pred_check_branch
        %385 = sbr.rel (%p383) target = $region40
      $region39: #{irisnet_forward.1} parent=35 // pred_region
        _
      $region40: #{irisnet_forward.1} parent=35 // pred_fallthru
        _
    $region36: #{irisnet_forward.1} parent=5 // pred_fallthru
      _
    %p386 = scmp.le.s32.totalorder 2, %s10
    // Predicated region
    $region41: #{irisnet_forward.1} parent=5 // pred_check
      %p387 = pneg %p386
    $region42: #{irisnet_forward.1} parent=5 // pred_check_branch
      %389 = sbr.rel (%p387) target = $region44
    $region43: #{irisnet_forward.1} parent=5 // pred_region
      %s390 = ssub.s32 %s10, 2
      // Predicated region
      $region45: #{irisnet_forward.1} parent=43 // pred_check
        %p391 = pneg %p128
      $region46: #{irisnet_forward.1} parent=43 // pred_check_branch
        %393 = sbr.rel (%p391) target = $region48
      $region47: #{irisnet_forward.1} parent=43 // pred_region
        %p394 = scmp.lt.s32.totalorder %s16, 1
        %s395 = scalar_select %p394, %s16, 1
        %s396 = smul.addr %s395, 8
        %s397 = scalar_lea.vmem %s4, %s396
      $region48: #{irisnet_forward.1} parent=43 // pred_fallthru
        _
    $region44: #{irisnet_forward.1} parent=5 // pred_fallthru
      _
  $region6: #{irisnet_forward.1} parent=0 // loop_footer
    %s14 = sadd.s32 1, %s10
  $region7: #{irisnet_forward.1} parent=0 // loop_footer_branch
    %9 = sbr.rel target = $region3
  $region8: #{irisnet_forward.1} parent=0 // loop_exit
    _

</llo_original>
